<compile_context>
chip_gen: v7x
topology: tpu7x:2x2x1
jax: 0.10.0
libtpu: 0.0.40
codegen_flags: <defaults>
</compile_context>

<pallas_src>
from functools import partial

import jax
import jax.numpy as jnp
from jax import lax
from jax.experimental import pallas as pl
from jax.experimental.pallas import tpu as pltpu


def _pick_time_chunk(T, max_chunk=32):
    """Largest divisor of T that is <= max_chunk."""
    tc = max(1, min(T, max_chunk))
    while T % tc:
        tc -= 1
    return tc


def _lstm_chunk_kernel(x_ref, wih_ref, whh_ref, bias_ref, out_ref,
                       xw_scr, h_scr, c_scr):
    """One time chunk of the LSTM recurrence.

    x_ref:    (Tc, B, I)  f32   raw inputs for this chunk
    wih_ref:  (I, 4H)     bf16  W_ih^T, i/f/o columns pre-scaled by 0.5
    whh_ref:  (H, 4H)     bf16  W_hh^T, i/f/o columns pre-scaled by 0.5
    bias_ref: (1, 4H)     f32   (b_ih + b_hh), i/f/o entries pre-scaled by 0.5
    out_ref:  (B, H)      f32   final hidden state (written on last chunk)
    xw_scr:   (Tc, B, 4H) f32   VMEM scratch for the chunk input projection
    h_scr/c_scr: (B, H)   f32   recurrent state carried across chunks
    """
    Tc, B, I = x_ref.shape
    H = whh_ref.shape[0]
    G = 4 * H

    @pl.when(pl.program_id(0) == 0)
    def _init():
        h_scr[...] = jnp.zeros_like(h_scr)
        c_scr[...] = jnp.zeros_like(c_scr)

    # Small weights hoisted into values (H=32: whh is ~2 bf16 vregs).
    # For H >= 128 keep reads on the ref instead (vld slot is free) or use the
    # weight-stationary MXU path.
    # TODO(synk): pltpu.matmul_push_rhs weight-stationary W_hh for H multiples
    # of the MXU tile (128/256); not applicable at H=32.
    wih = wih_ref[...]
    whh = whh_ref[...]
    bias = jnp.broadcast_to(bias_ref[...], (B, G))   # hoisted: no per-iter bcast

    # --- Input projection for this chunk (no serial dependence). ------------
    # Static Python loop over the (small, bounded) chunk length: one bf16 MXU
    # matmul per step, written to VMEM scratch; independent of h/c, so it
    # schedules ahead of / under the recurrence.
    for t in range(Tc):
        xw_scr[t] = (jnp.dot(x_ref[t].astype(jnp.bfloat16), wih,
                             preferred_element_type=jnp.float32) + bias)

    # --- Serial recurrence over the chunk; h/c carried in vregs. ------------
    def step(t, carry):
        h, c = carry
        gates = xw_scr[t] + jnp.dot(h.astype(jnp.bfloat16), whh,
                                    preferred_element_type=jnp.float32)
        # i/f/o columns were pre-scaled by 0.5, so ONE tanh over the whole
        # (B, 4H) vreg gives every gate:
        #   sigmoid(z) = 0.5*tanh(z/2) + 0.5  (i, f, o);   tanh(z)  (g).
        t_all = jnp.tanh(gates)
        # NOTE: 32-lane gate slices are sub-vreg at H=32; for production pick
        # H a multiple of 128 so each gate slice is whole vregs.
        i_g = 0.5 * t_all[:, 0 * H:1 * H] + 0.5
        f_g = 0.5 * t_all[:, 1 * H:2 * H] + 0.5
        g_g = t_all[:, 2 * H:3 * H]
        o_g = 0.5 * t_all[:, 3 * H:4 * H] + 0.5
        c_new = f_g * c + i_g * g_g
        h_new = o_g * jnp.tanh(c_new)
        return (h_new, c_new)

    # Unroll only within the (bounded) chunk — not over all of T.
    h_last, c_last = lax.fori_loop(0, Tc, step, (h_scr[...], c_scr[...]),
                                   unroll=True)
    h_scr[...] = h_last
    c_scr[...] = c_last

    @pl.when(pl.program_id(0) == pl.num_programs(0) - 1)
    def _finalize():
        out_ref[...] = h_last.astype(out_ref.dtype)


@partial(jax.jit, static_argnames=("time_chunk",))
def lstm_attention_forward(x, w_ih, w_hh, b_ih, b_hh, fc_w, fc_b, *,
                           time_chunk=None):
    """x: (T, B, I); returns context_vector[-1] of shape (B, H)."""
    T, B, I = x.shape
    H = w_hh.shape[1]
    G = 4 * H

    # Time chunk that divides T.
    # TODO(synk): support ragged T by masking a trailing partial chunk.
    Tc = _pick_time_chunk(T) if time_chunk is None else _pick_time_chunk(T, time_chunk)
    n_chunks = T // Tc

    # Pad batch to a multiple of 8 sublanes (padded rows are sliced off later).
    B_pad = ((B + 7) // 8) * 8
    x_p = jnp.pad(x, ((0, 0), (0, B_pad - B), (0, 0))) if B_pad != B else x
    x_p = x_p.astype(jnp.float32)

    # Pre-scale the i/f/o gate columns by 0.5 so the kernel needs a single
    # tanh per step: sigmoid(z) = 0.5*tanh(z/2) + 0.5.  Gate order i, f, g, o.
    gate_scale = jnp.concatenate([
        jnp.full((H,), 0.5, jnp.float32), jnp.full((H,), 0.5, jnp.float32),
        jnp.ones((H,), jnp.float32), jnp.full((H,), 0.5, jnp.float32)])
    wih_bf = (w_ih.T.astype(jnp.float32) * gate_scale[None, :]).astype(jnp.bfloat16)
    whh_bf = (w_hh.T.astype(jnp.float32) * gate_scale[None, :]).astype(jnp.bfloat16)
    bias_s = ((b_ih + b_hh).astype(jnp.float32) * gate_scale).reshape(1, G)

    h_last = pl.pallas_call(
        _lstm_chunk_kernel,
        out_shape=jax.ShapeDtypeStruct((B_pad, H), jnp.float32),
        grid_spec=pltpu.PrefetchScalarGridSpec(
            num_scalar_prefetch=0,
            grid=(n_chunks,),                                   # serial time axis
            in_specs=[
                pl.BlockSpec((Tc, B_pad, I), lambda k: (k, 0, 0)),  # x chunk
                pl.BlockSpec((I, G), lambda k: (0, 0)),             # W_ih^T
                pl.BlockSpec((H, G), lambda k: (0, 0)),             # W_hh^T
                pl.BlockSpec((1, G), lambda k: (0, 0)),             # bias
            ],
            out_specs=pl.BlockSpec((B_pad, H), lambda k: (0, 0)),   # h_T
            scratch_shapes=[
                pltpu.VMEM((Tc, B_pad, G), jnp.float32),   # chunk input proj
                pltpu.VMEM((B_pad, H), jnp.float32),       # h carry
                pltpu.VMEM((B_pad, H), jnp.float32),       # c carry
            ]),
        compiler_params=pltpu.CompilerParams(
            dimension_semantics=("arbitrary",)),
        cost_estimate=pl.CostEstimate(
            flops=2 * T * B_pad * G * (H + I),
            transcendentals=T * B_pad * (G + H),
            bytes_accessed=(T * B_pad * I + B_pad * H + G) * 4 + (I + H) * G * 2),
    )(x_p, wih_bf, whh_bf, bias_s)

    h_last = h_last[:B]

    # fc + softmax(dim=-1) + elementwise "attention", last step only.
    # softmax over a size-1 axis is identically 1, so this equals h_T exactly;
    # kept in the wrapper (plain JAX, trivial cost) for fidelity to the module.
    scores = jax.nn.softmax(h_last @ fc_w.T + fc_b, axis=-1)   # (B, 1) == 1.0
    return scores * h_last                                      # context[-1]


def _reference_forward(x, w_ih, w_hh, b_ih, b_hh, fc_w, fc_b):
    """Pure-JAX f32 reference replicating the PyTorch forward exactly."""
    T, B, I = x.shape
    H = w_hh.shape[1]

    def step(carry, x_t):
        h, c = carry
        gates = x_t @ w_ih.T + b_ih + h @ w_hh.T + b_hh
        i_g = jax.nn.sigmoid(gates[:, 0 * H:1 * H])
        f_g = jax.nn.sigmoid(gates[:, 1 * H:2 * H])
        g_g = jnp.tanh(gates[:, 2 * H:3 * H])
        o_g = jax.nn.sigmoid(gates[:, 3 * H:4 * H])
        c = f_g * c + i_g * g_g
        h = o_g * jnp.tanh(c)
        return (h, c), h

    h0 = jnp.zeros((B, H), jnp.float32)
    c0 = jnp.zeros((B, H), jnp.float32)
    (_, _), out = jax.lax.scan(step, (h0, c0), x)             # (T, B, H)
    scores = jax.nn.softmax(out @ fc_w.T + fc_b, axis=-1)     # (T, B, 1) -> 1
    context = scores * out
    return context[-1]


if __name__ == "__main__":
    # Small shapes consistent with nn.LSTM(input_size, hidden_size)
    seq_len, batch, input_size, hidden_size = 8, 2, 16, 32

    key = jax.random.PRNGKey(0)
    keys = jax.random.split(key, 8)
    bound = 1.0 / jnp.sqrt(hidden_size)

    # PyTorch-style uniform(-1/sqrt(H), 1/sqrt(H)) init.
    w_ih = jax.random.uniform(keys[0], (4 * hidden_size, input_size),
                              jnp.float32, -bound, bound)
    w_hh = jax.random.uniform(keys[1], (4 * hidden_size, hidden_size),
                              jnp.float32, -bound, bound)
    b_ih = jax.random.uniform(keys[2], (4 * hidden_size,), jnp.float32, -bound, bound)
    b_hh = jax.random.uniform(keys[3], (4 * hidden_size,), jnp.float32, -bound, bound)
    fc_w = jax.random.uniform(keys[4], (1, hidden_size), jnp.float32, -bound, bound)
    fc_b = jax.random.uniform(keys[5], (1,), jnp.float32, -bound, bound)

    x = jax.random.normal(keys[6], (seq_len, batch, input_size), jnp.float32)

    # time_chunk=4 -> grid=(2,) to exercise the chunked h/c-carry path.
    out = lstm_attention_forward(x, w_ih, w_hh, b_ih, b_hh, fc_w, fc_b,
                                 time_chunk=4)
    out = jax.block_until_ready(out)

    ref = _reference_forward(x, w_ih, w_hh, b_ih, b_hh, fc_w, fc_b)
    assert out.shape == (batch, hidden_size)
    # bf16 MXU inputs (f32 accumulate) -> loosened tolerance vs the f32 reference.
    assert jnp.allclose(out, ref, atol=3e-2, rtol=3e-2), "mismatch vs reference"

    print("KERNEL_OK")
</pallas_src>

<mosaic_0001>
module attributes {stable_mosaic.version = 11 : i64} {
  func.func @_lstm_chunk_kernel(%arg0: i32, %arg1: memref<4x8x16xf32, #tpu.memory_space<vmem>>, %arg2: memref<16x128xbf16, #tpu.memory_space<vmem>>, %arg3: memref<32x128xbf16, #tpu.memory_space<vmem>>, %arg4: memref<1x128xf32, #tpu.memory_space<vmem>>, %arg5: memref<8x32xf32, #tpu.memory_space<vmem>>, %arg6: memref<4x8x128xf32, #tpu.memory_space<vmem>>, %arg7: memref<8x32xf32, #tpu.memory_space<vmem>>, %arg8: memref<8x32xf32, #tpu.memory_space<vmem>>) attributes {dimension_semantics = [#tpu.dimension_semantics<arbitrary>], iteration_bounds = array<i64: 2>, scalar_prefetch = 0 : i64, scratch_operands = 3 : i64, tpu.core_type = #tpu.core_type<tc>, window_params = [{transform_indices = @transform_0, window_bounds = array<i64: 4, 8, 16>}, {pipeline_mode = #tpu.pipeline_mode<synchronous>, transform_indices = @transform_1, window_bounds = array<i64: 16, 128>}, {pipeline_mode = #tpu.pipeline_mode<synchronous>, transform_indices = @transform_2, window_bounds = array<i64: 32, 128>}, {pipeline_mode = #tpu.pipeline_mode<synchronous>, transform_indices = @transform_3, window_bounds = array<i64: 1, 128>}, {pipeline_mode = #tpu.pipeline_mode<synchronous>, transform_indices = @transform_4, window_bounds = array<i64: 8, 32>}]} {
    %c0_i32 = arith.constant 0 : i32
    %0 = arith.cmpi eq, %arg0, %c0_i32 : i32
    %1 = arith.extui %0 : i1 to i32
    %c0_i32_0 = arith.constant 0 : i32
    %2 = arith.cmpi ne, %1, %c0_i32_0 : i32
    scf.if %2 {
      %cst_77 = arith.constant 0.000000e+00 : f32
      %159 = vector.broadcast %cst_77 : f32 to vector<8x32xf32>
      %c0_78 = arith.constant 0 : index
      %c0_79 = arith.constant 0 : index
      %160 = vector.load %arg7[%c0_78, %c0_79] : memref<8x32xf32, #tpu.memory_space<vmem>>, vector<8x32xf32>
      tpu.vector_store %arg7[%c0_78, %c0_79], %159 {strides = array<i32>} : memref<8x32xf32, #tpu.memory_space<vmem>>, vector<8x32xf32>,
      %cst_80 = arith.constant 0.000000e+00 : f32
      %161 = vector.broadcast %cst_80 : f32 to vector<8x32xf32>
      %c0_81 = arith.constant 0 : index
      %c0_82 = arith.constant 0 : index
      %162 = vector.load %arg8[%c0_81, %c0_82] : memref<8x32xf32, #tpu.memory_space<vmem>>, vector<8x32xf32>
      tpu.vector_store %arg8[%c0_81, %c0_82], %161 {strides = array<i32>} : memref<8x32xf32, #tpu.memory_space<vmem>>, vector<8x32xf32>,
    } else {
    }
    %c0 = arith.constant 0 : index
    %c0_1 = arith.constant 0 : index
    %3 = vector.load %arg2[%c0, %c0_1] : memref<16x128xbf16, #tpu.memory_space<vmem>>, vector<16x128xbf16>
    %c0_2 = arith.constant 0 : index
    %c0_3 = arith.constant 0 : index
    %4 = vector.load %arg3[%c0_2, %c0_3] : memref<32x128xbf16, #tpu.memory_space<vmem>>, vector<32x128xbf16>
    %c0_4 = arith.constant 0 : index
    %c0_5 = arith.constant 0 : index
    %5 = vector.load %arg4[%c0_4, %c0_5] : memref<1x128xf32, #tpu.memory_space<vmem>>, vector<1x128xf32>
    %6 = vector.shape_cast %5 : vector<1x128xf32> to vector<1x128xf32>
    %7 = vector.broadcast %6 : vector<1x128xf32> to vector<8x128xf32>
    %c0_6 = arith.constant 0 : index
    %c0_7 = arith.constant 0 : index
    %c0_8 = arith.constant 0 : index
    %8 = vector.load %arg1[%c0_6, %c0_7, %c0_8] : memref<4x8x16xf32, #tpu.memory_space<vmem>>, vector<1x8x16xf32>
    %9 = vector.shape_cast %8 : vector<1x8x16xf32> to vector<8x16xf32>
    %10 = arith.truncf %9 : vector<8x16xf32> to vector<8x16xbf16>
    %cst = arith.constant dense<0.000000e+00> : vector<8x128xf32>
    %11 = tpu.matmul %10, %3, %cst {dimension_numbers = #tpu.dot_dimension_numbers<[1], [0], [0], [1], [0, 0, 1, 1], [], []>} : vector<8x16xbf16>, vector<16x128xbf16>, vector<8x128xf32> -> vector<8x128xf32>
    %12 = arith.addf %11, %7 : vector<8x128xf32>
    %c0_9 = arith.constant 0 : index
    %c0_10 = arith.constant 0 : index
    %c0_11 = arith.constant 0 : index
    %13 = vector.load %arg6[%c0_9, %c0_10, %c0_11] : memref<4x8x128xf32, #tpu.memory_space<vmem>>, vector<1x8x128xf32>
    %14 = vector.shape_cast %13 : vector<1x8x128xf32> to vector<8x128xf32>
    %15 = vector.shape_cast %12 : vector<8x128xf32> to vector<1x8x128xf32>
    tpu.vector_store %arg6[%c0_9, %c0_10, %c0_11], %15 {strides = array<i32>} : memref<4x8x128xf32, #tpu.memory_space<vmem>>, vector<1x8x128xf32>,
    %c1 = arith.constant 1 : index
    %c0_12 = arith.constant 0 : index
    %c0_13 = arith.constant 0 : index
    %16 = vector.load %arg1[%c1, %c0_12, %c0_13] : memref<4x8x16xf32, #tpu.memory_space<vmem>>, vector<1x8x16xf32>
    %17 = vector.shape_cast %16 : vector<1x8x16xf32> to vector<8x16xf32>
    %18 = arith.truncf %17 : vector<8x16xf32> to vector<8x16xbf16>
    %cst_14 = arith.constant dense<0.000000e+00> : vector<8x128xf32>
    %19 = tpu.matmul %18, %3, %cst_14 {dimension_numbers = #tpu.dot_dimension_numbers<[1], [0], [0], [1], [0, 0, 1, 1], [], []>} : vector<8x16xbf16>, vector<16x128xbf16>, vector<8x128xf32> -> vector<8x128xf32>
    %20 = arith.addf %19, %7 : vector<8x128xf32>
    %c1_15 = arith.constant 1 : index
    %c0_16 = arith.constant 0 : index
    %c0_17 = arith.constant 0 : index
    %21 = vector.load %arg6[%c1_15, %c0_16, %c0_17] : memref<4x8x128xf32, #tpu.memory_space<vmem>>, vector<1x8x128xf32>
    %22 = vector.shape_cast %21 : vector<1x8x128xf32> to vector<8x128xf32>
    %23 = vector.shape_cast %20 : vector<8x128xf32> to vector<1x8x128xf32>
    tpu.vector_store %arg6[%c1_15, %c0_16, %c0_17], %23 {strides = array<i32>} : memref<4x8x128xf32, #tpu.memory_space<vmem>>, vector<1x8x128xf32>,
    %c2 = arith.constant 2 : index
    %c0_18 = arith.constant 0 : index
    %c0_19 = arith.constant 0 : index
    %24 = vector.load %arg1[%c2, %c0_18, %c0_19] : memref<4x8x16xf32, #tpu.memory_space<vmem>>, vector<1x8x16xf32>
    %25 = vector.shape_cast %24 : vector<1x8x16xf32> to vector<8x16xf32>
    %26 = arith.truncf %25 : vector<8x16xf32> to vector<8x16xbf16>
    %cst_20 = arith.constant dense<0.000000e+00> : vector<8x128xf32>
    %27 = tpu.matmul %26, %3, %cst_20 {dimension_numbers = #tpu.dot_dimension_numbers<[1], [0], [0], [1], [0, 0, 1, 1], [], []>} : vector<8x16xbf16>, vector<16x128xbf16>, vector<8x128xf32> -> vector<8x128xf32>
    %28 = arith.addf %27, %7 : vector<8x128xf32>
    %c2_21 = arith.constant 2 : index
    %c0_22 = arith.constant 0 : index
    %c0_23 = arith.constant 0 : index
    %29 = vector.load %arg6[%c2_21, %c0_22, %c0_23] : memref<4x8x128xf32, #tpu.memory_space<vmem>>, vector<1x8x128xf32>
    %30 = vector.shape_cast %29 : vector<1x8x128xf32> to vector<8x128xf32>
    %31 = vector.shape_cast %28 : vector<8x128xf32> to vector<1x8x128xf32>
    tpu.vector_store %arg6[%c2_21, %c0_22, %c0_23], %31 {strides = array<i32>} : memref<4x8x128xf32, #tpu.memory_space<vmem>>, vector<1x8x128xf32>,
    %c3 = arith.constant 3 : index
    %c0_24 = arith.constant 0 : index
    %c0_25 = arith.constant 0 : index
    %32 = vector.load %arg1[%c3, %c0_24, %c0_25] : memref<4x8x16xf32, #tpu.memory_space<vmem>>, vector<1x8x16xf32>
    %33 = vector.shape_cast %32 : vector<1x8x16xf32> to vector<8x16xf32>
    %34 = arith.truncf %33 : vector<8x16xf32> to vector<8x16xbf16>
    %cst_26 = arith.constant dense<0.000000e+00> : vector<8x128xf32>
    %35 = tpu.matmul %34, %3, %cst_26 {dimension_numbers = #tpu.dot_dimension_numbers<[1], [0], [0], [1], [0, 0, 1, 1], [], []>} : vector<8x16xbf16>, vector<16x128xbf16>, vector<8x128xf32> -> vector<8x128xf32>
    %36 = arith.addf %35, %7 : vector<8x128xf32>
    %c3_27 = arith.constant 3 : index
    %c0_28 = arith.constant 0 : index
    %c0_29 = arith.constant 0 : index
    %37 = vector.load %arg6[%c3_27, %c0_28, %c0_29] : memref<4x8x128xf32, #tpu.memory_space<vmem>>, vector<1x8x128xf32>
    %38 = vector.shape_cast %37 : vector<1x8x128xf32> to vector<8x128xf32>
    %39 = vector.shape_cast %36 : vector<8x128xf32> to vector<1x8x128xf32>
    tpu.vector_store %arg6[%c3_27, %c0_28, %c0_29], %39 {strides = array<i32>} : memref<4x8x128xf32, #tpu.memory_space<vmem>>, vector<1x8x128xf32>,
    %c0_30 = arith.constant 0 : index
    %c0_31 = arith.constant 0 : index
    %40 = vector.load %arg7[%c0_30, %c0_31] : memref<8x32xf32, #tpu.memory_space<vmem>>, vector<8x32xf32>
    %c0_32 = arith.constant 0 : index
    %c0_33 = arith.constant 0 : index
    %41 = vector.load %arg8[%c0_32, %c0_33] : memref<8x32xf32, #tpu.memory_space<vmem>>, vector<8x32xf32>
    %c0_i32_34 = arith.constant 0 : i32
    %42 = arith.index_cast %c0_i32_34 : i32 to index
    %c0_35 = arith.constant 0 : index
    %c0_36 = arith.constant 0 : index
    %43 = vector.load %arg6[%42, %c0_35, %c0_36] : memref<4x8x128xf32, #tpu.memory_space<vmem>>, vector<1x8x128xf32>
    %44 = vector.shape_cast %43 : vector<1x8x128xf32> to vector<8x128xf32>
    %45 = arith.truncf %40 : vector<8x32xf32> to vector<8x32xbf16>
    %cst_37 = arith.constant dense<0.000000e+00> : vector<8x128xf32>
    %46 = tpu.matmul %45, %4, %cst_37 {dimension_numbers = #tpu.dot_dimension_numbers<[1], [0], [0], [1], [0, 0, 1, 1], [], []>} : vector<8x32xbf16>, vector<32x128xbf16>, vector<8x128xf32> -> vector<8x128xf32>
    %47 = arith.addf %44, %46 : vector<8x128xf32>
    %48 = math.tanh %47 : vector<8x128xf32>
    %49 = vector.extract_strided_slice %48 {offsets = [0, 0], sizes = [8, 32], strides = [1, 1]} : vector<8x128xf32> to vector<8x32xf32>
    %cst_38 = arith.constant 5.000000e-01 : f32
    %50 = vector.broadcast %cst_38 : f32 to vector<8x32xf32>
    %51 = arith.mulf %50, %49 : vector<8x32xf32>
    %cst_39 = arith.constant 5.000000e-01 : f32
    %52 = vector.broadcast %cst_39 : f32 to vector<8x32xf32>
    %53 = arith.addf %51, %52 : vector<8x32xf32>
    %54 = vector.extract_strided_slice %48 {offsets = [0, 32], sizes = [8, 32], strides = [1, 1]} : vector<8x128xf32> to vector<8x32xf32>
    %cst_40 = arith.constant 5.000000e-01 : f32
    %55 = vector.broadcast %cst_40 : f32 to vector<8x32xf32>
    %56 = arith.mulf %55, %54 : vector<8x32xf32>
    %cst_41 = arith.constant 5.000000e-01 : f32
    %57 = vector.broadcast %cst_41 : f32 to vector<8x32xf32>
    %58 = arith.addf %56, %57 : vector<8x32xf32>
    %59 = vector.extract_strided_slice %48 {offsets = [0, 64], sizes = [8, 32], strides = [1, 1]} : vector<8x128xf32> to vector<8x32xf32>
    %60 = vector.extract_strided_slice %48 {offsets = [0, 96], sizes = [8, 32], strides = [1, 1]} : vector<8x128xf32> to vector<8x32xf32>
    %cst_42 = arith.constant 5.000000e-01 : f32
    %61 = vector.broadcast %cst_42 : f32 to vector<8x32xf32>
    %62 = arith.mulf %61, %60 : vector<8x32xf32>
    %cst_43 = arith.constant 5.000000e-01 : f32
    %63 = vector.broadcast %cst_43 : f32 to vector<8x32xf32>
    %64 = arith.addf %62, %63 : vector<8x32xf32>
    %65 = arith.mulf %58, %41 : vector<8x32xf32>
    %66 = arith.mulf %53, %59 : vector<8x32xf32>
    %67 = arith.addf %65, %66 : vector<8x32xf32>
    %68 = math.tanh %67 : vector<8x32xf32>
    %69 = arith.mulf %64, %68 : vector<8x32xf32>
    %c1_i32 = arith.constant 1 : i32
    %70 = arith.index_cast %c1_i32 : i32 to index
    %c0_44 = arith.constant 0 : index
    %c0_45 = arith.constant 0 : index
    %71 = vector.load %arg6[%70, %c0_44, %c0_45] : memref<4x8x128xf32, #tpu.memory_space<vmem>>, vector<1x8x128xf32>
    %72 = vector.shape_cast %71 : vector<1x8x128xf32> to vector<8x128xf32>
    %73 = arith.truncf %69 : vector<8x32xf32> to vector<8x32xbf16>
    %cst_46 = arith.constant dense<0.000000e+00> : vector<8x128xf32>
    %74 = tpu.matmul %73, %4, %cst_46 {dimension_numbers = #tpu.dot_dimension_numbers<[1], [0], [0], [1], [0, 0, 1, 1], [], []>} : vector<8x32xbf16>, vector<32x128xbf16>, vector<8x128xf32> -> vector<8x128xf32>
    %75 = arith.addf %72, %74 : vector<8x128xf32>
    %76 = math.tanh %75 : vector<8x128xf32>
    %77 = vector.extract_strided_slice %76 {offsets = [0, 0], sizes = [8, 32], strides = [1, 1]} : vector<8x128xf32> to vector<8x32xf32>
    %cst_47 = arith.constant 5.000000e-01 : f32
    %78 = vector.broadcast %cst_47 : f32 to vector<8x32xf32>
    %79 = arith.mulf %78, %77 : vector<8x32xf32>
    %cst_48 = arith.constant 5.000000e-01 : f32
    %80 = vector.broadcast %cst_48 : f32 to vector<8x32xf32>
    %81 = arith.addf %79, %80 : vector<8x32xf32>
    %82 = vector.extract_strided_slice %76 {offsets = [0, 32], sizes = [8, 32], strides = [1, 1]} : vector<8x128xf32> to vector<8x32xf32>
    %cst_49 = arith.constant 5.000000e-01 : f32
    %83 = vector.broadcast %cst_49 : f32 to vector<8x32xf32>
    %84 = arith.mulf %83, %82 : vector<8x32xf32>
    %cst_50 = arith.constant 5.000000e-01 : f32
    %85 = vector.broadcast %cst_50 : f32 to vector<8x32xf32>
    %86 = arith.addf %84, %85 : vector<8x32xf32>
    %87 = vector.extract_strided_slice %76 {offsets = [0, 64], sizes = [8, 32], strides = [1, 1]} : vector<8x128xf32> to vector<8x32xf32>
    %88 = vector.extract_strided_slice %76 {offsets = [0, 96], sizes = [8, 32], strides = [1, 1]} : vector<8x128xf32> to vector<8x32xf32>
    %cst_51 = arith.constant 5.000000e-01 : f32
    %89 = vector.broadcast %cst_51 : f32 to vector<8x32xf32>
    %90 = arith.mulf %89, %88 : vector<8x32xf32>
    %cst_52 = arith.constant 5.000000e-01 : f32
    %91 = vector.broadcast %cst_52 : f32 to vector<8x32xf32>
    %92 = arith.addf %90, %91 : vector<8x32xf32>
    %93 = arith.mulf %86, %67 : vector<8x32xf32>
    %94 = arith.mulf %81, %87 : vector<8x32xf32>
    %95 = arith.addf %93, %94 : vector<8x32xf32>
    %96 = math.tanh %95 : vector<8x32xf32>
    %97 = arith.mulf %92, %96 : vector<8x32xf32>
    %c2_i32 = arith.constant 2 : i32
    %98 = arith.index_cast %c2_i32 : i32 to index
    %c0_53 = arith.constant 0 : index
    %c0_54 = arith.constant 0 : index
    %99 = vector.load %arg6[%98, %c0_53, %c0_54] : memref<4x8x128xf32, #tpu.memory_space<vmem>>, vector<1x8x128xf32>
    %100 = vector.shape_cast %99 : vector<1x8x128xf32> to vector<8x128xf32>
    %101 = arith.truncf %97 : vector<8x32xf32> to vector<8x32xbf16>
    %cst_55 = arith.constant dense<0.000000e+00> : vector<8x128xf32>
    %102 = tpu.matmul %101, %4, %cst_55 {dimension_numbers = #tpu.dot_dimension_numbers<[1], [0], [0], [1], [0, 0, 1, 1], [], []>} : vector<8x32xbf16>, vector<32x128xbf16>, vector<8x128xf32> -> vector<8x128xf32>
    %103 = arith.addf %100, %102 : vector<8x128xf32>
    %104 = math.tanh %103 : vector<8x128xf32>
    %105 = vector.extract_strided_slice %104 {offsets = [0, 0], sizes = [8, 32], strides = [1, 1]} : vector<8x128xf32> to vector<8x32xf32>
    %cst_56 = arith.constant 5.000000e-01 : f32
    %106 = vector.broadcast %cst_56 : f32 to vector<8x32xf32>
    %107 = arith.mulf %106, %105 : vector<8x32xf32>
    %cst_57 = arith.constant 5.000000e-01 : f32
    %108 = vector.broadcast %cst_57 : f32 to vector<8x32xf32>
    %109 = arith.addf %107, %108 : vector<8x32xf32>
    %110 = vector.extract_strided_slice %104 {offsets = [0, 32], sizes = [8, 32], strides = [1, 1]} : vector<8x128xf32> to vector<8x32xf32>
    %cst_58 = arith.constant 5.000000e-01 : f32
    %111 = vector.broadcast %cst_58 : f32 to vector<8x32xf32>
    %112 = arith.mulf %111, %110 : vector<8x32xf32>
    %cst_59 = arith.constant 5.000000e-01 : f32
    %113 = vector.broadcast %cst_59 : f32 to vector<8x32xf32>
    %114 = arith.addf %112, %113 : vector<8x32xf32>
    %115 = vector.extract_strided_slice %104 {offsets = [0, 64], sizes = [8, 32], strides = [1, 1]} : vector<8x128xf32> to vector<8x32xf32>
    %116 = vector.extract_strided_slice %104 {offsets = [0, 96], sizes = [8, 32], strides = [1, 1]} : vector<8x128xf32> to vector<8x32xf32>
    %cst_60 = arith.constant 5.000000e-01 : f32
    %117 = vector.broadcast %cst_60 : f32 to vector<8x32xf32>
    %118 = arith.mulf %117, %116 : vector<8x32xf32>
    %cst_61 = arith.constant 5.000000e-01 : f32
    %119 = vector.broadcast %cst_61 : f32 to vector<8x32xf32>
    %120 = arith.addf %118, %119 : vector<8x32xf32>
    %121 = arith.mulf %114, %95 : vector<8x32xf32>
    %122 = arith.mulf %109, %115 : vector<8x32xf32>
    %123 = arith.addf %121, %122 : vector<8x32xf32>
    %124 = math.tanh %123 : vector<8x32xf32>
    %125 = arith.mulf %120, %124 : vector<8x32xf32>
    %c3_i32 = arith.constant 3 : i32
    %126 = arith.index_cast %c3_i32 : i32 to index
    %c0_62 = arith.constant 0 : index
    %c0_63 = arith.constant 0 : index
    %127 = vector.load %arg6[%126, %c0_62, %c0_63] : memref<4x8x128xf32, #tpu.memory_space<vmem>>, vector<1x8x128xf32>
    %128 = vector.shape_cast %127 : vector<1x8x128xf32> to vector<8x128xf32>
    %129 = arith.truncf %125 : vector<8x32xf32> to vector<8x32xbf16>
    %cst_64 = arith.constant dense<0.000000e+00> : vector<8x128xf32>
    %130 = tpu.matmul %129, %4, %cst_64 {dimension_numbers = #tpu.dot_dimension_numbers<[1], [0], [0], [1], [0, 0, 1, 1], [], []>} : vector<8x32xbf16>, vector<32x128xbf16>, vector<8x128xf32> -> vector<8x128xf32>
    %131 = arith.addf %128, %130 : vector<8x128xf32>
    %132 = math.tanh %131 : vector<8x128xf32>
    %133 = vector.extract_strided_slice %132 {offsets = [0, 0], sizes = [8, 32], strides = [1, 1]} : vector<8x128xf32> to vector<8x32xf32>
    %cst_65 = arith.constant 5.000000e-01 : f32
    %134 = vector.broadcast %cst_65 : f32 to vector<8x32xf32>
    %135 = arith.mulf %134, %133 : vector<8x32xf32>
    %cst_66 = arith.constant 5.000000e-01 : f32
    %136 = vector.broadcast %cst_66 : f32 to vector<8x32xf32>
    %137 = arith.addf %135, %136 : vector<8x32xf32>
    %138 = vector.extract_strided_slice %132 {offsets = [0, 32], sizes = [8, 32], strides = [1, 1]} : vector<8x128xf32> to vector<8x32xf32>
    %cst_67 = arith.constant 5.000000e-01 : f32
    %139 = vector.broadcast %cst_67 : f32 to vector<8x32xf32>
    %140 = arith.mulf %139, %138 : vector<8x32xf32>
    %cst_68 = arith.constant 5.000000e-01 : f32
    %141 = vector.broadcast %cst_68 : f32 to vector<8x32xf32>
    %142 = arith.addf %140, %141 : vector<8x32xf32>
    %143 = vector.extract_strided_slice %132 {offsets = [0, 64], sizes = [8, 32], strides = [1, 1]} : vector<8x128xf32> to vector<8x32xf32>
    %144 = vector.extract_strided_slice %132 {offsets = [0, 96], sizes = [8, 32], strides = [1, 1]} : vector<8x128xf32> to vector<8x32xf32>
    %cst_69 = arith.constant 5.000000e-01 : f32
    %145 = vector.broadcast %cst_69 : f32 to vector<8x32xf32>
    %146 = arith.mulf %145, %144 : vector<8x32xf32>
    %cst_70 = arith.constant 5.000000e-01 : f32
    %147 = vector.broadcast %cst_70 : f32 to vector<8x32xf32>
    %148 = arith.addf %146, %147 : vector<8x32xf32>
    %149 = arith.mulf %142, %123 : vector<8x32xf32>
    %150 = arith.mulf %137, %143 : vector<8x32xf32>
    %151 = arith.addf %149, %150 : vector<8x32xf32>
    %152 = math.tanh %151 : vector<8x32xf32>
    %153 = arith.mulf %148, %152 : vector<8x32xf32>
    %c4_i32 = arith.constant 4 : i32
    %c0_71 = arith.constant 0 : index
    %c0_72 = arith.constant 0 : index
    %154 = vector.load %arg7[%c0_71, %c0_72] : memref<8x32xf32, #tpu.memory_space<vmem>>, vector<8x32xf32>
    tpu.vector_store %arg7[%c0_71, %c0_72], %153 {strides = array<i32>} : memref<8x32xf32, #tpu.memory_space<vmem>>, vector<8x32xf32>,
    %c0_73 = arith.constant 0 : index
    %c0_74 = arith.constant 0 : index
    %155 = vector.load %arg8[%c0_73, %c0_74] : memref<8x32xf32, #tpu.memory_space<vmem>>, vector<8x32xf32>
    tpu.vector_store %arg8[%c0_73, %c0_74], %151 {strides = array<i32>} : memref<8x32xf32, #tpu.memory_space<vmem>>, vector<8x32xf32>,
    %c1_i32_75 = arith.constant 1 : i32
    %156 = arith.cmpi eq, %arg0, %c1_i32_75 : i32
    %157 = arith.extui %156 : i1 to i32
    %c0_i32_76 = arith.constant 0 : i32
    %158 = arith.cmpi ne, %157, %c0_i32_76 : i32
    scf.if %158 {
      %c0_77 = arith.constant 0 : index
      %c0_78 = arith.constant 0 : index
      %159 = vector.load %arg5[%c0_77, %c0_78] : memref<8x32xf32, #tpu.memory_space<vmem>>, vector<8x32xf32>
      tpu.vector_store %arg5[%c0_77, %c0_78], %153 {strides = array<i32>} : memref<8x32xf32, #tpu.memory_space<vmem>>, vector<8x32xf32>,
    } else {
    }
    return
  }
  func.func @transform_0(%arg0: i32) -> (i32, i32, i32) {
    %c0_i32 = arith.constant 0 : i32
    %c0_i32_0 = arith.constant 0 : i32
    %c0_i32_1 = arith.constant 0 : i32
    return %arg0, %c0_i32, %c0_i32_0 : i32, i32, i32
  }
  func.func @transform_1(%arg0: i32) -> (i32, i32) {
    %c0_i32 = arith.constant 0 : i32
    %c0_i32_0 = arith.constant 0 : i32
    %c0_i32_1 = arith.constant 0 : i32
    return %c0_i32, %c0_i32_0 : i32, i32
  }
  func.func @transform_2(%arg0: i32) -> (i32, i32) {
    %c0_i32 = arith.constant 0 : i32
    %c0_i32_0 = arith.constant 0 : i32
    %c0_i32_1 = arith.constant 0 : i32
    return %c0_i32, %c0_i32_0 : i32, i32
  }
  func.func @transform_3(%arg0: i32) -> (i32, i32) {
    %c0_i32 = arith.constant 0 : i32
    %c0_i32_0 = arith.constant 0 : i32
    %c0_i32_1 = arith.constant 0 : i32
    return %c0_i32, %c0_i32_0 : i32, i32
  }
  func.func @transform_4(%arg0: i32) -> (i32, i32) {
    %c0_i32 = arith.constant 0 : i32
    %c0_i32_0 = arith.constant 0 : i32
    %c0_i32_1 = arith.constant 0 : i32
    return %c0_i32, %c0_i32_0 : i32, i32
  }
}

</mosaic_0001>

<llo_original>
// kernel: lstm_attention_forward.1
$region0: #{lstm_attention_forward.1}
  #allocation0 [shape = 'u32[]', space=smem, size = 0x4, offset = 0x4, fixed_abs, tag = 'smem constant byte address 0x4 - core index']
  #allocation1 [shape = 'u32[144,128]{1,0:T(1,128)}', space=vmem, size = 0x12000, scoped, tag = 'internal scratch']
  #allocation2 [shape = 'f32[4,8,128]{2,1,0:T(8,128)}', space=vmem, size = 0x4000, scoped, tag = 'scratch operand']
  #allocation3 [shape = 'f32[8,32]{1,0:T(8,128)}', space=vmem, size = 0x1000, scoped, tag = 'scratch operand']
  #allocation4 [shape = 'f32[8,32]{1,0:T(8,128)}', space=vmem, size = 0x1000, scoped, tag = 'scratch operand']
  %s0 = inlined_call_operand.vmem [shape: f32[8,8,16], index: 0, kind: input, shape index: {}]
  %s1 = inlined_call_operand.vmem [shape: bf16[16,128], index: 1, kind: input, shape index: {}]
  %s2 = inlined_call_operand.vmem [shape: bf16[32,128], index: 2, kind: input, shape index: {}]
  %s3 = inlined_call_operand.vmem [shape: f32[1,128], index: 3, kind: input, shape index: {}]
  %s4 = inlined_call_operand.vmem [shape: f32[8,32], index: 4, kind: output, shape index: {}]
  %s5 = sld [smem:[#allocation0]]
  $region57: #{lstm_attention_forward.1} parent=0
    _
  %s7 = ssub.s32 1, %s5
  %s8 = scalar_select 0, %s7, %s5
  loop: start=0, step=1, limit=4
  $region2: #{lstm_attention_forward.1} parent=0 // loop_pre_header
    _
  $region3: #{lstm_attention_forward.1} parent=0 // loop_header
    %s10 = sphi 0, %s14
    %p11 = scmp.ge.s32.totalorder %s10, 4
    %s20 = sphi 0, %s22
    %s23 = sphi 0, %s20
    %s24 = sphi 0, %s23
    %s40 = sphi 0, %s24
    %s44 = sphi 0, %s44
    %s46 = sphi 0, %s44
    %s47 = sphi 0, %s46
    %s61 = sphi 0, %s47
    %s65 = sphi 0, %s65
    %s67 = sphi 0, %s65
    %s68 = sphi 0, %s67
    %s82 = sphi 0, %s68
    %s86 = sphi 0, %s86
    %s88 = sphi 0, %s86
    %s89 = sphi 0, %s88
    %s103 = sphi 0, %s89
    %s107 = sphi 0, %s107
    %s109 = sphi 0, %s107
    %s110 = sphi 0, %s109
    %s124 = sphi 0, %s110
  $region4: #{lstm_attention_forward.1} parent=0 // loop_header_branch
    %13 = sbr.rel (%p11) target = $region8
  $region5: #{lstm_attention_forward.1} parent=0 // loop_body
    %s15 = ssub.s32 %s10, 1
    %s16 = ssub.s32 %s10, 2
    %s17 = sadd.s32 %s10, 1
    %s18 = ssub.s32 %s10, %s17
    %p19 = scmp.eq.s32.totalorder %s18, 0
    %s21 = sadd.s32 %s20, 1
    %s22 = scalar_select %p19, %s20, %s21
    %p25 = pneg %p19
    %p26 = scmp.eq.s32.totalorder %s10, 1
    %p27 = por %p25, %p26
    %p28 = scmp.ne.s32.totalorder %s20, %s23
    %p29 = scmp.eq.s32.totalorder %s10, 0
    %p30 = por %p28, %p29
    %p31 = scmp.ne.s32.totalorder %s20, %s23
    %p32 = scmp.eq.s32.totalorder %s15, 1
    %p33 = por %p31, %p32
    %p34 = scmp.ne.s32.totalorder %s23, %s24
    %p35 = scmp.eq.s32.totalorder %s15, 0
    %p36 = por %p34, %p35
    %p37 = scmp.ne.s32.totalorder %s23, %s24
    %p38 = scmp.eq.s32.totalorder %s16, 1
    %p39 = por %p37, %p38
    %p41 = scmp.ne.s32.totalorder %s24, %s40
    %p42 = scmp.eq.s32.totalorder %s16, 0
    %p43 = por %p41, %p42
    %s45 = sadd.s32 %s44, 1
    %p48 = scmp.eq.s32.totalorder %s10, 1
    %p49 = scmp.ne.s32.totalorder %s44, %s46
    %p50 = scmp.eq.s32.totalorder %s10, 0
    %p51 = por %p49, %p50
    %p52 = scmp.ne.s32.totalorder %s44, %s46
    %p53 = scmp.eq.s32.totalorder %s15, 1
    %p54 = por %p52, %p53
    %p55 = scmp.ne.s32.totalorder %s46, %s47
    %p56 = scmp.eq.s32.totalorder %s15, 0
    %p57 = por %p55, %p56
    %p58 = scmp.ne.s32.totalorder %s46, %s47
    %p59 = scmp.eq.s32.totalorder %s16, 1
    %p60 = por %p58, %p59
    %p62 = scmp.ne.s32.totalorder %s47, %s61
    %p63 = scmp.eq.s32.totalorder %s16, 0
    %p64 = por %p62, %p63
    %s66 = sadd.s32 %s65, 1
    %p69 = scmp.eq.s32.totalorder %s10, 1
    %p70 = scmp.ne.s32.totalorder %s65, %s67
    %p71 = scmp.eq.s32.totalorder %s10, 0
    %p72 = por %p70, %p71
    %p73 = scmp.ne.s32.totalorder %s65, %s67
    %p74 = scmp.eq.s32.totalorder %s15, 1
    %p75 = por %p73, %p74
    %p76 = scmp.ne.s32.totalorder %s67, %s68
    %p77 = scmp.eq.s32.totalorder %s15, 0
    %p78 = por %p76, %p77
    %p79 = scmp.ne.s32.totalorder %s67, %s68
    %p80 = scmp.eq.s32.totalorder %s16, 1
    %p81 = por %p79, %p80
    %p83 = scmp.ne.s32.totalorder %s68, %s82
    %p84 = scmp.eq.s32.totalorder %s16, 0
    %p85 = por %p83, %p84
    %s87 = sadd.s32 %s86, 1
    %p90 = scmp.eq.s32.totalorder %s10, 1
    %p91 = scmp.ne.s32.totalorder %s86, %s88
    %p92 = scmp.eq.s32.totalorder %s10, 0
    %p93 = por %p91, %p92
    %p94 = scmp.ne.s32.totalorder %s86, %s88
    %p95 = scmp.eq.s32.totalorder %s15, 1
    %p96 = por %p94, %p95
    %p97 = scmp.ne.s32.totalorder %s88, %s89
    %p98 = scmp.eq.s32.totalorder %s15, 0
    %p99 = por %p97, %p98
    %p100 = scmp.ne.s32.totalorder %s88, %s89
    %p101 = scmp.eq.s32.totalorder %s16, 1
    %p102 = por %p100, %p101
    %p104 = scmp.ne.s32.totalorder %s89, %s103
    %p105 = scmp.eq.s32.totalorder %s16, 0
    %p106 = por %p104, %p105
    %s108 = sadd.s32 %s107, 1
    %p111 = scmp.eq.s32.totalorder %s10, 1
    %p112 = scmp.ne.s32.totalorder %s107, %s109
    %p113 = scmp.eq.s32.totalorder %s10, 0
    %p114 = por %p112, %p113
    %p115 = scmp.ne.s32.totalorder %s107, %s109
    %p116 = scmp.eq.s32.totalorder %s15, 1
    %p117 = por %p115, %p116
    %p118 = scmp.ne.s32.totalorder %s109, %s110
    %p119 = scmp.eq.s32.totalorder %s15, 0
    %p120 = por %p118, %p119
    %p121 = scmp.ne.s32.totalorder %s109, %s110
    %p122 = scmp.eq.s32.totalorder %s16, 1
    %p123 = por %p121, %p122
    %p125 = scmp.ne.s32.totalorder %s110, %s124
    %p126 = scmp.eq.s32.totalorder %s16, 0
    %p127 = por %p125, %p126
    %p128 = scmp.le.s32.totalorder 1, %s10
    %p129 = scmp.lt.s32.totalorder %s10, 3
    %p130 = pnand %p128, %p129
    %p131 = pneg %p130
    // Predicated region
    $region9: #{lstm_attention_forward.1} parent=5 // pred_check
      _
    $region10: #{lstm_attention_forward.1} parent=5 // pred_check_branch
      %133 = sbr.rel (%p130) target = $region12
    $region11: #{lstm_attention_forward.1} parent=5 // pred_region
      %s134 = ssub.s32 %s10, 1
      // Predicated region
      $region13: #{lstm_attention_forward.1} parent=11 // pred_check
        %p135 = pneg %p57
      $region14: #{lstm_attention_forward.1} parent=11 // pred_check_branch
        %137 = sbr.rel (%p135) target = $region16
      $region15: #{lstm_attention_forward.1} parent=11 // pred_region
        _
      $region16: #{lstm_attention_forward.1} parent=11 // pred_fallthru
        _
      // Predicated region
      $region17: #{lstm_attention_forward.1} parent=11 // pred_check
        %p138 = pneg %p78
      $region18: #{lstm_attention_forward.1} parent=11 // pred_check_branch
        %140 = sbr.rel (%p138) target = $region20
      $region19: #{lstm_attention_forward.1} parent=11 // pred_region
        _
      $region20: #{lstm_attention_forward.1} parent=11 // pred_fallthru
        _
      // Predicated region
      $region21: #{lstm_attention_forward.1} parent=11 // pred_check
        %p141 = pneg %p99
      $region22: #{lstm_attention_forward.1} parent=11 // pred_check_branch
        %143 = sbr.rel (%p141) target = $region24
      $region23: #{lstm_attention_forward.1} parent=11 // pred_region
        _
      $region24: #{lstm_attention_forward.1} parent=11 // pred_fallthru
        _
    $region12: #{lstm_attention_forward.1} parent=5 // pred_fallthru
      _
    %p144 = scmp.lt.s32.totalorder %s10, 2
    // Predicated region
    $region25: #{lstm_attention_forward.1} parent=5 // pred_check
      %p145 = pneg %p144
    $region26: #{lstm_attention_forward.1} parent=5 // pred_check_branch
      %147 = sbr.rel (%p145) target = $region28
    $region27: #{lstm_attention_forward.1} parent=5 // pred_region
      // Predicated region
      $region29: #{lstm_attention_forward.1} parent=27 // pred_check
        %p148 = pneg %p30
      $region30: #{lstm_attention_forward.1} parent=27 // pred_check_branch
        %150 = sbr.rel (%p148) target = $region32
      $region31: #{lstm_attention_forward.1} parent=27 // pred_region
        %s151 = smul.u32 4, %s10
        %p152 = scmp.lt.s32.totalorder %s151, 7
        %s153 = scalar_select %p152, %s151, 7
        %s154 = smul.addr %s153, 8
        %s155 = scalar_lea.vmem %s0, %s154
        %s156 = smul.u32 4, %s10
      $region32: #{lstm_attention_forward.1} parent=27 // pred_fallthru
        _
    $region28: #{lstm_attention_forward.1} parent=5 // pred_fallthru
      _
    %p157 = scmp.le.s32.totalorder 1, %s10
    %p158 = scmp.lt.s32.totalorder %s10, 3
    %p159 = pnand %p157, %p158
    %p160 = pneg %p159
    // Predicated region
    $region33: #{lstm_attention_forward.1} parent=5 // pred_check
      _
    $region34: #{lstm_attention_forward.1} parent=5 // pred_check_branch
      %162 = sbr.rel (%p159) target = $region36
    $region35: #{lstm_attention_forward.1} parent=5 // pred_region
      %s163 = ssub.s32 %s10, 1
      %s164 = smul.u32 4, %s15
      %p165 = scmp.lt.s32.totalorder %s164, 7
      %s166 = scalar_select %p165, %s164, 7
      %s167 = smul.addr %s166, 8
      %s168 = scalar_lea.vmem %s0, %s167
      %p169 = pneg %p36
      %p170 = pneg %p33
      %p171 = pneg %p57
      %p172 = pneg %p54
      %p173 = pneg %p78
      %p174 = pneg %p75
      %p175 = pneg %p99
      %p176 = pneg %p96
      %p177 = pneg %p120
      %p178 = pneg %p117
      %s179 = smul.u32 4, %s15
      %p180 = scmp.lt.s32.totalorder %s179, 7
      %s181 = scalar_select %p180, %s179, 7
      %s182 = smul.addr %s181, 8
      %s183 = scalar_lea.vmem %s0, %s182
      %s184 = smul.u32 4, %s15
      %p186 = scmp.eq.s32.totalorder %s15, 0
      // Predicated region
      $region37: #{lstm_attention_forward.1} parent=35 // pred_check
        %p187 = pneg %p186
      $region38: #{lstm_attention_forward.1} parent=35 // pred_check_branch
        %189 = sbr.rel (%p187) target = $region40
      $region39: #{lstm_attention_forward.1} parent=35 // pred_region
        %vm190 = vcmask 261120
        %191 = vst.msk [vmem:[#allocation3] sm:$0xff] %vm190, 0.0
        %192 = vst.msk [vmem:[#allocation4] sm:$0xff] %vm190, 0.0
      $region40: #{lstm_attention_forward.1} parent=35 // pred_fallthru
        _
      %v193 = vld [vmem:[%s1] sm:$0xf]
      %v194 = vld [vmem:[%s1 + $0x4] sm:$0xf]
      %v195 = vld [vmem:[%s2] sm:$0xf]
      %v196 = vld [vmem:[%s2 + $0x4] sm:$0xf]
      %v197 = vld [vmem:[%s2 + $0x8] sm:$0xf]
      %v198 = vld [vmem:[%s2 + $0xc] sm:$0xf]
      %v199 = vld [vmem:[%s3] sm:$0x1]
      %v201 = vlaneseq
      %v202 = vshrl.u32 %v201, 7
      %v203 = vsub.s32 0, %v202
      %v204 = vrot.slane %v199, %v203
      %v206 = vld [vmem:[%s183] sm:$0xff]
      %v207 = vpack.c.bf16 %v206, %v206
      %v210 = vunpack.c.l.b16 %v193
      %v211 = vunpack.c.l.b16 %v194
      %v212 = vpack.c.b16 %v211, %v210
      %vm214 = vcmask 130048
      %v216 = vsel %vm214, %v207, 0
      %218 = vmatprep.subr.bf16.mxu0 0
      %219 = vmatpush1.bf16.msra.mxu0 %v212
      %220 = vmatprep.subr.bf16.mxu0 0
      %221 = vmatpush1.bf16.msra.mxu0 0
      %222 = vmatprep.subr.bf16.mxu0 0
      %223 = vmatpush1.bf16.msra.mxu0 0
      %224 = vmatprep.subr.bf16.mxu0 0
      %225 = vmatpush1.bf16.msra.mxu0 0
      %226 = vmatprep.subr.bf16.mxu0 0
      %227 = vmatpush1.bf16.msra.mxu0 0
      %228 = vmatprep.subr.bf16.mxu0 0
      %229 = vmatpush1.bf16.msra.mxu0 0
      %230 = vmatprep.subr.bf16.mxu0 0
      %231 = vmatpush1.bf16.msra.mxu0 0
      %232 = vmatprep.subr.bf16.mxu0 0
      %233 = vmatpush1.bf16.msra.mxu0 0
      %234 = vmatprep.subr.bf16.mxu0 0
      %235 = vmatpush1.bf16.msra.mxu0 0
      %236 = vmatprep.subr.bf16.mxu0 0
      %237 = vmatpush1.bf16.msra.mxu0 0
      %238 = vmatprep.subr.bf16.mxu0 0
      %239 = vmatpush1.bf16.msra.mxu0 0
      %240 = vmatprep.subr.bf16.mxu0 0
      %241 = vmatpush1.bf16.msra.mxu0 0
      %242 = vmatprep.subr.bf16.mxu0 0
      %243 = vmatpush1.bf16.msra.mxu0 0
      %244 = vmatprep.subr.bf16.mxu0 0
      %245 = vmatpush1.bf16.msra.mxu0 0
      %246 = vmatprep.subr.bf16.mxu0 0
      %247 = vmatpush1.bf16.msra.mxu0 0
      %248 = vmatprep.subr.bf16.mxu0 0
      %249 = vmatpush1.bf16.msra.mxu0 0
      %250 = vmatprep.mubr.bf16.mxu0 0
      %251 = vmatmul.mubr.bf16.gmra.mrb[0].mxu0 %v216
      %v252 = vpop.f32.mrb[0].mxu0
      %v253 = vadd.f32 %v204, %v252
      %v254 = vpop.f32.mrb[0].mxu0
      %v255 = vpop.f32.mrb[0].mxu0
      %v256 = vpop.f32.mrb[0].mxu0
      %257 = vdwg.mxu0
      %258 = vst [vmem:[#allocation2] sm:$0xff] %v253
      %s259 = scalar_lea.vmem %s183, 8
      %v260 = vld [vmem:[%s259] sm:$0xff]
      %v261 = vpack.c.bf16 %v260, %v260
      %v263 = vsel %vm214, %v261, 0
      %265 = vmatprep.subr.bf16.mxu0 0
      %266 = vmatpush1.bf16.msra.mxu0 %v212
      %267 = vmatprep.subr.bf16.mxu0 0
      %268 = vmatpush1.bf16.msra.mxu0 0
      %269 = vmatprep.subr.bf16.mxu0 0
      %270 = vmatpush1.bf16.msra.mxu0 0
      %271 = vmatprep.subr.bf16.mxu0 0
      %272 = vmatpush1.bf16.msra.mxu0 0
      %273 = vmatprep.subr.bf16.mxu0 0
      %274 = vmatpush1.bf16.msra.mxu0 0
      %275 = vmatprep.subr.bf16.mxu0 0
      %276 = vmatpush1.bf16.msra.mxu0 0
      %277 = vmatprep.subr.bf16.mxu0 0
      %278 = vmatpush1.bf16.msra.mxu0 0
      %279 = vmatprep.subr.bf16.mxu0 0
      %280 = vmatpush1.bf16.msra.mxu0 0
      %281 = vmatprep.subr.bf16.mxu0 0
      %282 = vmatpush1.bf16.msra.mxu0 0
      %283 = vmatprep.subr.bf16.mxu0 0
      %284 = vmatpush1.bf16.msra.mxu0 0
      %285 = vmatprep.subr.bf16.mxu0 0
      %286 = vmatpush1.bf16.msra.mxu0 0
      %287 = vmatprep.subr.bf16.mxu0 0
      %288 = vmatpush1.bf16.msra.mxu0 0
      %289 = vmatprep.subr.bf16.mxu0 0
      %290 = vmatpush1.bf16.msra.mxu0 0
      %291 = vmatprep.subr.bf16.mxu0 0
      %292 = vmatpush1.bf16.msra.mxu0 0
      %293 = vmatprep.subr.bf16.mxu0 0
      %294 = vmatpush1.bf16.msra.mxu0 0
      %295 = vmatprep.subr.bf16.mxu0 0
      %296 = vmatpush1.bf16.msra.mxu0 0
      %297 = vmatprep.mubr.bf16.mxu0 0
      %298 = vmatmul.mubr.bf16.gmra.mrb[0].mxu0 %v263
      %v299 = vpop.f32.mrb[0].mxu0
      %v300 = vadd.f32 %v204, %v299
      %v301 = vpop.f32.mrb[0].mxu0
      %v302 = vpop.f32.mrb[0].mxu0
      %v303 = vpop.f32.mrb[0].mxu0
      %304 = vdwg.mxu0
      %s305 = scalar_lea.vmem [#allocation2], 8
      %306 = vst [vmem:[%s305] sm:$0xff] %v300
      %s307 = scalar_lea.vmem %s183, 16
      %v308 = vld [vmem:[%s307] sm:$0xff]
      %v309 = vpack.c.bf16 %v308, %v308
      %v311 = vsel %vm214, %v309, 0
      %313 = vmatprep.subr.bf16.mxu0 0
      %314 = vmatpush1.bf16.msra.mxu0 %v212
      %315 = vmatprep.subr.bf16.mxu0 0
      %316 = vmatpush1.bf16.msra.mxu0 0
      %317 = vmatprep.subr.bf16.mxu0 0
      %318 = vmatpush1.bf16.msra.mxu0 0
      %319 = vmatprep.subr.bf16.mxu0 0
      %320 = vmatpush1.bf16.msra.mxu0 0
      %321 = vmatprep.subr.bf16.mxu0 0
      %322 = vmatpush1.bf16.msra.mxu0 0
      %323 = vmatprep.subr.bf16.mxu0 0
      %324 = vmatpush1.bf16.msra.mxu0 0
      %325 = vmatprep.subr.bf16.mxu0 0
      %326 = vmatpush1.bf16.msra.mxu0 0
      %327 = vmatprep.subr.bf16.mxu0 0
      %328 = vmatpush1.bf16.msra.mxu0 0
      %329 = vmatprep.subr.bf16.mxu0 0
      %330 = vmatpush1.bf16.msra.mxu0 0
      %331 = vmatprep.subr.bf16.mxu0 0
      %332 = vmatpush1.bf16.msra.mxu0 0
      %333 = vmatprep.subr.bf16.mxu0 0
      %334 = vmatpush1.bf16.msra.mxu0 0
      %335 = vmatprep.subr.bf16.mxu0 0
      %336 = vmatpush1.bf16.msra.mxu0 0
      %337 = vmatprep.subr.bf16.mxu0 0
      %338 = vmatpush1.bf16.msra.mxu0 0
      %339 = vmatprep.subr.bf16.mxu0 0
      %340 = vmatpush1.bf16.msra.mxu0 0
      %341 = vmatprep.subr.bf16.mxu0 0
      %342 = vmatpush1.bf16.msra.mxu0 0
      %343 = vmatprep.subr.bf16.mxu0 0
      %344 = vmatpush1.bf16.msra.mxu0 0
      %345 = vmatprep.mubr.bf16.mxu0 0
      %346 = vmatmul.mubr.bf16.gmra.mrb[0].mxu0 %v311
      %v347 = vpop.f32.mrb[0].mxu0
      %v348 = vadd.f32 %v204, %v347
      %v349 = vpop.f32.mrb[0].mxu0
      %v350 = vpop.f32.mrb[0].mxu0
      %v351 = vpop.f32.mrb[0].mxu0
      %352 = vdwg.mxu0
      %s353 = scalar_lea.vmem [#allocation2], 16
      %354 = vst [vmem:[%s353] sm:$0xff] %v348
      %s355 = scalar_lea.vmem %s183, 24
      %v356 = vld [vmem:[%s355] sm:$0xff]
      %v357 = vpack.c.bf16 %v356, %v356
      %v359 = vsel %vm214, %v357, 0
      %361 = vmatprep.subr.bf16.mxu0 0
      %362 = vmatpush1.bf16.msra.mxu0 %v212
      %363 = vmatprep.subr.bf16.mxu0 0
      %364 = vmatpush1.bf16.msra.mxu0 0
      %365 = vmatprep.subr.bf16.mxu0 0
      %366 = vmatpush1.bf16.msra.mxu0 0
      %367 = vmatprep.subr.bf16.mxu0 0
      %368 = vmatpush1.bf16.msra.mxu0 0
      %369 = vmatprep.subr.bf16.mxu0 0
      %370 = vmatpush1.bf16.msra.mxu0 0
      %371 = vmatprep.subr.bf16.mxu0 0
      %372 = vmatpush1.bf16.msra.mxu0 0
      %373 = vmatprep.subr.bf16.mxu0 0
      %374 = vmatpush1.bf16.msra.mxu0 0
      %375 = vmatprep.subr.bf16.mxu0 0
      %376 = vmatpush1.bf16.msra.mxu0 0
      %377 = vmatprep.subr.bf16.mxu0 0
      %378 = vmatpush1.bf16.msra.mxu0 0
      %379 = vmatprep.subr.bf16.mxu0 0
      %380 = vmatpush1.bf16.msra.mxu0 0
      %381 = vmatprep.subr.bf16.mxu0 0
      %382 = vmatpush1.bf16.msra.mxu0 0
      %383 = vmatprep.subr.bf16.mxu0 0
      %384 = vmatpush1.bf16.msra.mxu0 0
      %385 = vmatprep.subr.bf16.mxu0 0
      %386 = vmatpush1.bf16.msra.mxu0 0
      %387 = vmatprep.subr.bf16.mxu0 0
      %388 = vmatpush1.bf16.msra.mxu0 0
      %389 = vmatprep.subr.bf16.mxu0 0
      %390 = vmatpush1.bf16.msra.mxu0 0
      %391 = vmatprep.subr.bf16.mxu0 0
      %392 = vmatpush1.bf16.msra.mxu0 0
      %393 = vmatprep.mubr.bf16.mxu0 0
      %394 = vmatmul.mubr.bf16.gmra.mrb[0].mxu0 %v359
      %v395 = vpop.f32.mrb[0].mxu0
      %v396 = vadd.f32 %v204, %v395
      %v397 = vpop.f32.mrb[0].mxu0
      %v398 = vpop.f32.mrb[0].mxu0
      %v399 = vpop.f32.mrb[0].mxu0
      %400 = vdwg.mxu0
      %s401 = scalar_lea.vmem [#allocation2], 24
      %402 = vst [vmem:[%s401] sm:$0xff] %v396
      %v403 = vld [vmem:[#allocation3] sm:$0xff]
      %v404 = vld [vmem:[#allocation4] sm:$0xff]
      %v405 = vld [vmem:[#allocation2] sm:$0xff]
      %v406 = vpack.c.bf16 %v403, %v403
      %v411 = vunpack.c.l.b16 %v195
      %v412 = vunpack.c.l.b16 %v196
      %v413 = vunpack.c.l.b16 %v197
      %v414 = vunpack.c.l.b16 %v198
      %v415 = vpack.c.b16 %v412, %v411
      %v416 = vpack.c.b16 %v414, %v413
      %vm419 = vcmask 261120
      %v421 = vsel %vm419, %v406, 0
      %423 = vmatprep.subr.bf16.mxu0 0
      %424 = vmatpush1.bf16.msra.mxu0 %v415
      %425 = vmatprep.subr.bf16.mxu0 0
      %426 = vmatpush1.bf16.msra.mxu0 %v416
      %427 = vmatprep.subr.bf16.mxu0 0
      %428 = vmatpush1.bf16.msra.mxu0 0
      %429 = vmatprep.subr.bf16.mxu0 0
      %430 = vmatpush1.bf16.msra.mxu0 0
      %431 = vmatprep.subr.bf16.mxu0 0
      %432 = vmatpush1.bf16.msra.mxu0 0
      %433 = vmatprep.subr.bf16.mxu0 0
      %434 = vmatpush1.bf16.msra.mxu0 0
      %435 = vmatprep.subr.bf16.mxu0 0
      %436 = vmatpush1.bf16.msra.mxu0 0
      %437 = vmatprep.subr.bf16.mxu0 0
      %438 = vmatpush1.bf16.msra.mxu0 0
      %439 = vmatprep.subr.bf16.mxu0 0
      %440 = vmatpush1.bf16.msra.mxu0 0
      %441 = vmatprep.subr.bf16.mxu0 0
      %442 = vmatpush1.bf16.msra.mxu0 0
      %443 = vmatprep.subr.bf16.mxu0 0
      %444 = vmatpush1.bf16.msra.mxu0 0
      %445 = vmatprep.subr.bf16.mxu0 0
      %446 = vmatpush1.bf16.msra.mxu0 0
      %447 = vmatprep.subr.bf16.mxu0 0
      %448 = vmatpush1.bf16.msra.mxu0 0
      %449 = vmatprep.subr.bf16.mxu0 0
      %450 = vmatpush1.bf16.msra.mxu0 0
      %451 = vmatprep.subr.bf16.mxu0 0
      %452 = vmatpush1.bf16.msra.mxu0 0
      %453 = vmatprep.subr.bf16.mxu0 0
      %454 = vmatpush1.bf16.msra.mxu0 0
      %455 = vmatprep.mubr.bf16.mxu0 0
      %456 = vmatmul.mubr.bf16.gmra.mrb[0].mxu0 %v421
      %v457 = vpop.f32.mrb[0].mxu0
      %v458 = vadd.f32 0.0, %v457
      %v459 = vpop.f32.mrb[0].mxu0
      %v460 = vpop.f32.mrb[0].mxu0
      %v461 = vpop.f32.mrb[0].mxu0
      %462 = vdwg.mxu0
      %v463 = vadd.f32 %v405, %v458
      %v464 = vtanh.pop %v463
      %v465 = vmul.f32 %v464, 0.5
      %v466 = vadd.f32 %v465, 0.5
      %468 = vrot.lane.b32.xlu0 %v404, 32
      %v469 = vpop.permute.xlu0 %468
      %v471 = vmul.f32 %v466, %v469
      %473 = vrot.lane.b32.xlu0 %v464, 64
      %v474 = vpop.permute.xlu0 %473
      %v476 = vmul.f32 %v466, %v474
      %478 = vrot.lane.b32.xlu0 %v476, 32
      %v479 = vpop.permute.xlu0 %478
      %v481 = vadd.f32 %v471, %v479
      %v482 = vtanh.pop %v481
      %484 = vrot.lane.b32.xlu0 %v482, 64
      %v485 = vpop.permute.xlu0 %484
      %v487 = vmul.f32 %v466, %v485
      %v488 = vld [vmem:[%s305] sm:$0xff]
      %v489 = vpack.c.bf16 %v487, %v487
      %491 = vrot.lane.b32.xlu0 %v489, 32
      %v492 = vpop.permute.xlu0 %491
      %v494 = vsel %vm419, %v492, 0
      %496 = vmatprep.subr.bf16.mxu0 0
      %497 = vmatpush1.bf16.msra.mxu0 %v415
      %498 = vmatprep.subr.bf16.mxu0 0
      %499 = vmatpush1.bf16.msra.mxu0 %v416
      %500 = vmatprep.subr.bf16.mxu0 0
      %501 = vmatpush1.bf16.msra.mxu0 0
      %502 = vmatprep.subr.bf16.mxu0 0
      %503 = vmatpush1.bf16.msra.mxu0 0
      %504 = vmatprep.subr.bf16.mxu0 0
      %505 = vmatpush1.bf16.msra.mxu0 0
      %506 = vmatprep.subr.bf16.mxu0 0
      %507 = vmatpush1.bf16.msra.mxu0 0
      %508 = vmatprep.subr.bf16.mxu0 0
      %509 = vmatpush1.bf16.msra.mxu0 0
      %510 = vmatprep.subr.bf16.mxu0 0
      %511 = vmatpush1.bf16.msra.mxu0 0
      %512 = vmatprep.subr.bf16.mxu0 0
      %513 = vmatpush1.bf16.msra.mxu0 0
      %514 = vmatprep.subr.bf16.mxu0 0
      %515 = vmatpush1.bf16.msra.mxu0 0
      %516 = vmatprep.subr.bf16.mxu0 0
      %517 = vmatpush1.bf16.msra.mxu0 0
      %518 = vmatprep.subr.bf16.mxu0 0
      %519 = vmatpush1.bf16.msra.mxu0 0
      %520 = vmatprep.subr.bf16.mxu0 0
      %521 = vmatpush1.bf16.msra.mxu0 0
      %522 = vmatprep.subr.bf16.mxu0 0
      %523 = vmatpush1.bf16.msra.mxu0 0
      %524 = vmatprep.subr.bf16.mxu0 0
      %525 = vmatpush1.bf16.msra.mxu0 0
      %526 = vmatprep.subr.bf16.mxu0 0
      %527 = vmatpush1.bf16.msra.mxu0 0
      %528 = vmatprep.mubr.bf16.mxu0 0
      %529 = vmatmul.mubr.bf16.gmra.mrb[0].mxu0 %v494
      %v530 = vpop.f32.mrb[0].mxu0
      %v531 = vadd.f32 0.0, %v530
      %v532 = vpop.f32.mrb[0].mxu0
      %v533 = vpop.f32.mrb[0].mxu0
      %v534 = vpop.f32.mrb[0].mxu0
      %535 = vdwg.mxu0
      %v536 = vadd.f32 %v488, %v531
      %v537 = vtanh.pop %v536
      %v538 = vmul.f32 %v537, 0.5
      %v539 = vadd.f32 %v538, 0.5
      %v540 = vmul.f32 %v539, %v481
      %542 = vrot.lane.b32.xlu0 %v537, 64
      %v543 = vpop.permute.xlu0 %542
      %v545 = vmul.f32 %v539, %v543
      %547 = vrot.lane.b32.xlu0 %v545, 32
      %v548 = vpop.permute.xlu0 %547
      %v550 = vadd.f32 %v540, %v548
      %v551 = vtanh.pop %v550
      %553 = vrot.lane.b32.xlu0 %v551, 64
      %v554 = vpop.permute.xlu0 %553
      %v556 = vmul.f32 %v539, %v554
      %v557 = vld [vmem:[%s353] sm:$0xff]
      %v558 = vpack.c.bf16 %v556, %v556
      %560 = vrot.lane.b32.xlu0 %v558, 32
      %v561 = vpop.permute.xlu0 %560
      %v563 = vsel %vm419, %v561, 0
      %565 = vmatprep.subr.bf16.mxu0 0
      %566 = vmatpush1.bf16.msra.mxu0 %v415
      %567 = vmatprep.subr.bf16.mxu0 0
      %568 = vmatpush1.bf16.msra.mxu0 %v416
      %569 = vmatprep.subr.bf16.mxu0 0
      %570 = vmatpush1.bf16.msra.mxu0 0
      %571 = vmatprep.subr.bf16.mxu0 0
      %572 = vmatpush1.bf16.msra.mxu0 0
      %573 = vmatprep.subr.bf16.mxu0 0
      %574 = vmatpush1.bf16.msra.mxu0 0
      %575 = vmatprep.subr.bf16.mxu0 0
      %576 = vmatpush1.bf16.msra.mxu0 0
      %577 = vmatprep.subr.bf16.mxu0 0
      %578 = vmatpush1.bf16.msra.mxu0 0
      %579 = vmatprep.subr.bf16.mxu0 0
      %580 = vmatpush1.bf16.msra.mxu0 0
      %581 = vmatprep.subr.bf16.mxu0 0
      %582 = vmatpush1.bf16.msra.mxu0 0
      %583 = vmatprep.subr.bf16.mxu0 0
      %584 = vmatpush1.bf16.msra.mxu0 0
      %585 = vmatprep.subr.bf16.mxu0 0
      %586 = vmatpush1.bf16.msra.mxu0 0
      %587 = vmatprep.subr.bf16.mxu0 0
      %588 = vmatpush1.bf16.msra.mxu0 0
      %589 = vmatprep.subr.bf16.mxu0 0
      %590 = vmatpush1.bf16.msra.mxu0 0
      %591 = vmatprep.subr.bf16.mxu0 0
      %592 = vmatpush1.bf16.msra.mxu0 0
      %593 = vmatprep.subr.bf16.mxu0 0
      %594 = vmatpush1.bf16.msra.mxu0 0
      %595 = vmatprep.subr.bf16.mxu0 0
      %596 = vmatpush1.bf16.msra.mxu0 0
      %597 = vmatprep.mubr.bf16.mxu0 0
      %598 = vmatmul.mubr.bf16.gmra.mrb[0].mxu0 %v563
      %v599 = vpop.f32.mrb[0].mxu0
      %v600 = vadd.f32 0.0, %v599
      %v601 = vpop.f32.mrb[0].mxu0
      %v602 = vpop.f32.mrb[0].mxu0
      %v603 = vpop.f32.mrb[0].mxu0
      %604 = vdwg.mxu0
      %v605 = vadd.f32 %v557, %v600
      %v606 = vtanh.pop %v605
      %v607 = vmul.f32 %v606, 0.5
      %v608 = vadd.f32 %v607, 0.5
      %v609 = vmul.f32 %v608, %v550
      %611 = vrot.lane.b32.xlu0 %v606, 64
      %v612 = vpop.permute.xlu0 %611
      %v614 = vmul.f32 %v608, %v612
      %616 = vrot.lane.b32.xlu0 %v614, 32
      %v617 = vpop.permute.xlu0 %616
      %v619 = vadd.f32 %v609, %v617
      %v620 = vtanh.pop %v619
      %622 = vrot.lane.b32.xlu0 %v620, 64
      %v623 = vpop.permute.xlu0 %622
      %v625 = vmul.f32 %v608, %v623
      %v626 = vld [vmem:[%s401] sm:$0xff]
      %v627 = vpack.c.bf16 %v625, %v625
      %629 = vrot.lane.b32.xlu0 %v627, 32
      %v630 = vpop.permute.xlu0 %629
      %v632 = vsel %vm419, %v630, 0
      %634 = vmatprep.subr.bf16.mxu0 0
      %635 = vmatpush1.bf16.msra.mxu0 %v415
      %636 = vmatprep.subr.bf16.mxu0 0
      %637 = vmatpush1.bf16.msra.mxu0 %v416
      %638 = vmatprep.subr.bf16.mxu0 0
      %639 = vmatpush1.bf16.msra.mxu0 0
      %640 = vmatprep.subr.bf16.mxu0 0
      %641 = vmatpush1.bf16.msra.mxu0 0
      %642 = vmatprep.subr.bf16.mxu0 0
      %643 = vmatpush1.bf16.msra.mxu0 0
      %644 = vmatprep.subr.bf16.mxu0 0
      %645 = vmatpush1.bf16.msra.mxu0 0
      %646 = vmatprep.subr.bf16.mxu0 0
      %647 = vmatpush1.bf16.msra.mxu0 0
      %648 = vmatprep.subr.bf16.mxu0 0
      %649 = vmatpush1.bf16.msra.mxu0 0
      %650 = vmatprep.subr.bf16.mxu0 0
      %651 = vmatpush1.bf16.msra.mxu0 0
      %652 = vmatprep.subr.bf16.mxu0 0
      %653 = vmatpush1.bf16.msra.mxu0 0
      %654 = vmatprep.subr.bf16.mxu0 0
      %655 = vmatpush1.bf16.msra.mxu0 0
      %656 = vmatprep.subr.bf16.mxu0 0
      %657 = vmatpush1.bf16.msra.mxu0 0
      %658 = vmatprep.subr.bf16.mxu0 0
      %659 = vmatpush1.bf16.msra.mxu0 0
      %660 = vmatprep.subr.bf16.mxu0 0
      %661 = vmatpush1.bf16.msra.mxu0 0
      %662 = vmatprep.subr.bf16.mxu0 0
      %663 = vmatpush1.bf16.msra.mxu0 0
      %664 = vmatprep.subr.bf16.mxu0 0
      %665 = vmatpush1.bf16.msra.mxu0 0
      %666 = vmatprep.mubr.bf16.mxu0 0
      %667 = vmatmul.mubr.bf16.gmra.mrb[0].mxu0 %v632
      %v668 = vpop.f32.mrb[0].mxu0
      %v669 = vadd.f32 0.0, %v668
      %v670 = vpop.f32.mrb[0].mxu0
      %v671 = vpop.f32.mrb[0].mxu0
      %v672 = vpop.f32.mrb[0].mxu0
      %673 = vdwg.mxu0
      %v674 = vadd.f32 %v626, %v669
      %v675 = vtanh.pop %v674
      %v676 = vmul.f32 %v675, 0.5
      %v677 = vadd.f32 %v676, 0.5
      %v678 = vmul.f32 %v677, %v619
      %680 = vrot.lane.b32.xlu0 %v675, 64
      %v681 = vpop.permute.xlu0 %680
      %v683 = vmul.f32 %v677, %v681
      %685 = vrot.lane.b32.xlu0 %v683, 32
      %v686 = vpop.permute.xlu0 %685
      %v688 = vadd.f32 %v678, %v686
      %v689 = vtanh.pop %v688
      %691 = vrot.lane.b32.xlu0 %v689, 64
      %v692 = vpop.permute.xlu0 %691
      %v694 = vmul.f32 %v677, %v692
      %696 = vrot.lane.b32.xlu0 %v694, 32
      %v697 = vpop.permute.xlu0 %696
      %699 = vst.msk [vmem:[#allocation3] sm:$0xff] %vm419, %v697
      %701 = vrot.lane.b32.xlu0 %v688, 96
      %v702 = vpop.permute.xlu0 %701
      %704 = vst.msk [vmem:[#allocation4] sm:$0xff] %vm419, %v702
      %p705 = scmp.eq.s32.totalorder %s15, 1
      // Predicated region
      $region41: #{lstm_attention_forward.1} parent=35 // pred_check
        %p706 = pneg %p705
      $region42: #{lstm_attention_forward.1} parent=35 // pred_check_branch
        %708 = sbr.rel (%p706) target = $region44
      $region43: #{lstm_attention_forward.1} parent=35 // pred_region
        %709 = vst.msk [vmem:[%s4] sm:$0xff] %vm419, %v697
      $region44: #{lstm_attention_forward.1} parent=35 // pred_fallthru
        _
      // Predicated region
      $region45: #{lstm_attention_forward.1} parent=35 // pred_check
        %p710 = pneg %p117
      $region46: #{lstm_attention_forward.1} parent=35 // pred_check_branch
        %712 = sbr.rel (%p710) target = $region48
      $region47: #{lstm_attention_forward.1} parent=35 // pred_region
        _
      $region48: #{lstm_attention_forward.1} parent=35 // pred_fallthru
        _
      // Predicated region
      $region49: #{lstm_attention_forward.1} parent=35 // pred_check
        %p713 = pneg %p117
      $region50: #{lstm_attention_forward.1} parent=35 // pred_check_branch
        %715 = sbr.rel (%p713) target = $region52
      $region51: #{lstm_attention_forward.1} parent=35 // pred_region
        _
      $region52: #{lstm_attention_forward.1} parent=35 // pred_fallthru
        _
    $region36: #{lstm_attention_forward.1} parent=5 // pred_fallthru
      _
    %p716 = scmp.le.s32.totalorder 2, %s10
    // Predicated region
    $region53: #{lstm_attention_forward.1} parent=5 // pred_check
      %p717 = pneg %p716
    $region54: #{lstm_attention_forward.1} parent=5 // pred_check_branch
      %719 = sbr.rel (%p717) target = $region56
    $region55: #{lstm_attention_forward.1} parent=5 // pred_region
      %s720 = ssub.s32 %s10, 2
    $region56: #{lstm_attention_forward.1} parent=5 // pred_fallthru
      _
  $region6: #{lstm_attention_forward.1} parent=0 // loop_footer
    %s14 = sadd.s32 1, %s10
  $region7: #{lstm_attention_forward.1} parent=0 // loop_footer_branch
    %9 = sbr.rel target = $region3
  $region8: #{lstm_attention_forward.1} parent=0 // loop_exit
    _

</llo_original>
